<compile_context>
chip_gen: v6e
topology: v6e:2x2x1
jax: 0.10.0
libtpu: 0.0.40
codegen_flags: <defaults>
</compile_context>

<pallas_src>
import math
from functools import partial

import jax
import jax.numpy as jnp
from jax.experimental import pallas as pl
from jax.experimental.pallas import tpu as pltpu


def make_sinusoidal_pe(max_len, d_model):
    """Matches the PyTorch buffer: pe[:, 0::2] = sin(pos*div), pe[:, 1::2] = cos(pos*div)."""
    position = jnp.arange(max_len, dtype=jnp.float32)[:, None]                 # (L, 1)
    div_term = jnp.exp(jnp.arange(0, d_model, 2, dtype=jnp.float32)
                       * (-math.log(10000.0) / d_model))                       # (D/2,)
    ang = position * div_term                                                  # (L, D/2)
    pe = jnp.zeros((max_len, d_model), jnp.float32)
    pe = pe.at[:, 0::2].set(jnp.sin(ang))
    pe = pe.at[:, 1::2].set(jnp.cos(ang))
    return pe


def _lowbias32(x):
    """Portable 32-bit integer hash (lowbias32) on uint32 arrays; VPU-only ops."""
    x = x ^ (x >> 16)
    x = x * jnp.uint32(0x7FEB352D)
    x = x ^ (x >> 15)
    x = x * jnp.uint32(0x846CA68B)
    x = x ^ (x >> 16)
    return x


def pe_dropout_kernel(seed_ref, x_ref, pe_ref, out_ref, *, p, training):
    # seed_ref: (1,) int32 in SMEM; x_ref/out_ref: (TB, TC); pe_ref: (1, TC)  (all one block).
    y = x_ref[...] + pe_ref[...]                      # PE broadcast-add over batch sublanes
    if training and p > 0.0:                          # static (Python) branch
        tb, tc = y.shape
        row0 = pl.program_id(0) * tb                  # global offsets -> tiling-invariant mask
        col0 = pl.program_id(1) * tc
        r = (jax.lax.broadcasted_iota(jnp.int32, (tb, tc), 0) + row0).astype(jnp.uint32)
        c = (jax.lax.broadcasted_iota(jnp.int32, (tb, tc), 1) + col0).astype(jnp.uint32)
        seed = seed_ref[0].astype(jnp.uint32)
        key = (r * jnp.uint32(0x9E3779B1)) ^ (c * jnp.uint32(0x85EBCA77)) ^ seed
        bits = _lowbias32(key)                        # ~uniform uint32
        threshold = jnp.uint32(min(int(round((1.0 - p) * 4294967296.0)), 0xFFFFFFFF))
        keep = bits < threshold                       # P(keep) = 1 - p, raw uint32 compare
        y = jnp.where(keep, y * (1.0 / (1.0 - p)), jnp.zeros_like(y))   # inverted dropout
    out_ref[...] = y.astype(out_ref.dtype)


def _pick_blocks(n_rows, n_cols, itemsize, max_block_bytes=4 << 20):
    """Block shape: last dim multiple of 128 (or full), rows multiple of 8 (or full),
    each block capped at ~4 MiB so 2x(in+out) double-buffers fit every generation's VMEM."""
    if n_cols <= 128:
        tc = n_cols
    else:
        budget_cols = max(128, (max_block_bytes // (8 * itemsize)) // 128 * 128)
        tc = n_cols if n_cols <= budget_cols else budget_cols
    budget_rows = max(8, (max_block_bytes // (tc * itemsize)) // 8 * 8)
    tb = n_rows if n_rows <= budget_rows else budget_rows
    return tb, tc


def positional_encoding_forward(x, pe, *, dropout_p, training=False, seed=0):
    """x: (B, S, D). Returns dropout(x + pe[:S, :]) with shape (B, S, D)."""
    B, S, D = x.shape
    assert pe.shape[0] >= S and pe.shape[1] == D
    p = float(dropout_p)
    assert 0.0 <= p < 1.0, "dropout_p must be in [0, 1)"

    SD = S * D
    x2 = x.reshape(B, SD)                                        # lane-dense slab (free reshape)
    pe2 = pe[:S, :].reshape(1, SD).astype(x.dtype)               # pe[:S] as a single row, x dtype
    seed_arr = jnp.asarray([seed], dtype=jnp.int32)

    TB, TC = _pick_blocks(B, SD, jnp.dtype(x.dtype).itemsize)
    grid = (pl.cdiv(B, TB), pl.cdiv(SD, TC))

    kernel = partial(pe_dropout_kernel, p=p, training=bool(training))
    out = pl.pallas_call(
        kernel,
        out_shape=jax.ShapeDtypeStruct((B, SD), x.dtype),
        grid=grid,
        in_specs=[
            pl.BlockSpec(memory_space=pltpu.MemorySpace.SMEM),         # dropout seed scalar
            pl.BlockSpec((TB, TC), lambda i, j: (i, j)),               # x block
            pl.BlockSpec((1, TC), lambda i, j: (0, j)),                # pe row block
        ],
        out_specs=pl.BlockSpec((TB, TC), lambda i, j: (i, j)),
        input_output_aliases={1: 0},                                   # out overwrites the x slab
        compiler_params=pltpu.CompilerParams(
            dimension_semantics=("parallel", "parallel"),
            vmem_limit_bytes=48 * 1024 * 1024,
        ),
    )(seed_arr, x2, pe2)
    return out.reshape(B, S, D)


if __name__ == "__main__":
    key = jax.random.PRNGKey(0)
    B, S, D = 2, 8, 32
    MAX_LEN = 64
    DROPOUT_P = 0.1

    x = jax.random.normal(key, (B, S, D), dtype=jnp.float32)
    pe = make_sinusoidal_pe(MAX_LEN, D)          # init-time buffer, like register_buffer
    ref = x + pe[:S][None, :, :]

    # Eval / inference mode: dropout is the identity.
    y = positional_encoding_forward(x, pe, dropout_p=DROPOUT_P, training=False, seed=0)
    jax.block_until_ready(y)
    assert y.shape == (B, S, D) and y.dtype == jnp.float32
    assert jnp.allclose(y, ref, atol=1e-6), "eval-mode output must equal x + pe[:S]"

    # Training mode: inverted dropout, mask generated in-kernel.
    # TODO(synk): nn.Dropout draws its mask from torch's RNG stream; here the mask comes from a
    # counter-based hash (portable to TPU and interpret mode), so the drop pattern (not its
    # statistics) differs from PyTorch.
    y_tr = positional_encoding_forward(x, pe, dropout_p=DROPOUT_P, training=True, seed=1234)
    jax.block_until_ready(y_tr)
    assert y_tr.shape == (B, S, D)
    scale = 1.0 / (1.0 - DROPOUT_P)
    err_kept = jnp.where(y_tr != 0.0, jnp.abs(y_tr - ref * scale), 0.0)
    assert float(jnp.max(err_kept)) < 1e-5, "kept elements must equal (x + pe) / (1 - p)"
    drop_frac = float(jnp.mean((y_tr == 0.0).astype(jnp.float32)))
    assert drop_frac < 0.5, "dropout rate looks wrong"

    print("KERNEL_OK")
</pallas_src>

<mosaic_0001>
module attributes {stable_mosaic.version = 11 : i64} {
  func.func @pe_dropout_kernel(%arg0: i32, %arg1: i32, %arg2: memref<1xi32, #tpu.memory_space<smem>>, %arg3: memref<2x256xf32, #tpu.memory_space<vmem>>, %arg4: memref<1x256xf32, #tpu.memory_space<vmem>>, %arg5: memref<2x256xf32, #tpu.memory_space<vmem>>) attributes {dimension_semantics = [#tpu.dimension_semantics<parallel>, #tpu.dimension_semantics<parallel>], iteration_bounds = array<i64: 1, 1>, scalar_prefetch = 0 : i64, scratch_operands = 0 : i64, tpu.core_type = #tpu.core_type<tc>, window_params = [{transform_indices = @transform_0, window_bounds = array<i64: 1>}, {transform_indices = @transform_1, window_bounds = array<i64: 2, 256>}, {transform_indices = @transform_2, window_bounds = array<i64: 1, 256>}, {transform_indices = @transform_3, window_bounds = array<i64: 2, 256>}]} {
    %c0 = arith.constant 0 : index
    %c0_0 = arith.constant 0 : index
    %0 = vector.load %arg3[%c0, %c0_0] : memref<2x256xf32, #tpu.memory_space<vmem>>, vector<2x256xf32>
    %c0_1 = arith.constant 0 : index
    %c0_2 = arith.constant 0 : index
    %1 = vector.load %arg4[%c0_1, %c0_2] : memref<1x256xf32, #tpu.memory_space<vmem>>, vector<1x256xf32>
    %2 = vector.broadcast %1 : vector<1x256xf32> to vector<2x256xf32>
    %3 = arith.addf %0, %2 : vector<2x256xf32>
    %c0_3 = arith.constant 0 : index
    %c0_4 = arith.constant 0 : index
    %4 = vector.load %arg5[%c0_3, %c0_4] : memref<2x256xf32, #tpu.memory_space<vmem>>, vector<2x256xf32>
    tpu.vector_store %arg5[%c0_3, %c0_4], %3 {strides = array<i32>} : memref<2x256xf32, #tpu.memory_space<vmem>>, vector<2x256xf32>,
    return
  }
  func.func @transform_0(%arg0: i32, %arg1: i32) -> i32 {
    %c0_i32 = arith.constant 0 : i32
    %c0_i32_0 = arith.constant 0 : i32
    return %c0_i32 : i32
  }
  func.func @transform_1(%arg0: i32, %arg1: i32) -> (i32, i32) {
    %c0_i32 = arith.constant 0 : i32
    return %arg0, %arg1 : i32, i32
  }
  func.func @transform_2(%arg0: i32, %arg1: i32) -> (i32, i32) {
    %c0_i32 = arith.constant 0 : i32
    %c0_i32_0 = arith.constant 0 : i32
    return %c0_i32, %arg1 : i32, i32
  }
  func.func @transform_3(%arg0: i32, %arg1: i32) -> (i32, i32) {
    %c0_i32 = arith.constant 0 : i32
    return %arg0, %arg1 : i32, i32
  }
}

</mosaic_0001>

<llo_original>
// kernel: tpu_custom_call.1
$region0: #{tpu_custom_call.1}
  #allocation0 [shape = 'u32[]', space=smem, size = 0x4, offset = 0x4, fixed_abs, tag = 'smem constant byte address 0x4 - core index']
  #allocation1 [shape = 'u32[144,128]{1,0:T(1,128)}', space=vmem, size = 0x12000, scoped, tag = 'internal scratch']
  #allocation2 [shape = 's32[1]{0:T(128)S(6)}', space=smem, size = 0x200, scoped, tag = 'scoped memory for tpu_custom_call.1']
  %s0 = inlined_call_operand.<no memory space> [shape: s32[1], index: 0, kind: input, shape index: {}]
  %s1 = inlined_call_operand.hbm [shape: f32[2,256], index: 1, kind: input, shape index: {}, may-alias: {1,3}]
  %s2 = inlined_call_operand.vmem [shape: f32[1,256], index: 2, kind: input, shape index: {}]
  %s3 = inlined_call_operand.hbm [shape: f32[2,256], index: 3, kind: output, shape index: {}, may-alias: {1,3}]
  %s4 = sld [smem:[#allocation0]]
  $region26: #{tpu_custom_call.1} parent=0
    _
  %s6 = ssub.s32 1, %s4
  %s7 = scalar_select 0, %s6, %s4
  %8 = sst [smem:[#allocation2]] %s0
  $region1: #{tpu_custom_call.1} parent=0
    #allocation3 [shape = 'u8[2048]{0}', space=vmem, size = 0x800, scoped, tag = 'input window, operand 1, single buffered']
    #allocation4 [shape = 's32[1]{0}', space=sflag, size = 0x4, scoped, tag = 'scoped memory for tpu_custom_call.1']
    #allocation5 [shape = 's32[1]{0}', space=sflag, size = 0x4, scoped, tag = 'scoped memory for tpu_custom_call.1']
    #allocation6 [shape = 'u8[2048]{0}', space=vmem, size = 0x800, scoped, tag = 'output window, operand 0, single buffered']
    %9 = vsyncpa [#allocation4], 0
    %10 = vsyncpa [#allocation5], 0
    // Predicated region
    $region2: #{tpu_custom_call.1} parent=1 // pred_check
      _
    $region3: #{tpu_custom_call.1} parent=1 // pred_check_branch
      %12 = sbr.rel (0) target = $region5
    $region4: #{tpu_custom_call.1} parent=1 // pred_region
      _
    $region5: #{tpu_custom_call.1} parent=1 // pred_fallthru
      _
    // Predicated region
    $region6: #{tpu_custom_call.1} parent=1 // pred_check
      _
    $region7: #{tpu_custom_call.1} parent=1 // pred_check_branch
      %14 = sbr.rel (0) target = $region9
    $region8: #{tpu_custom_call.1} parent=1 // pred_region
      %s16 = ssub.s32 64, 64
      %17 = vsyncadd [#allocation4], %s16
      %s19 = sshll.u32 [#allocation3], 4
      %s20 = int_to_ptr.vmem [resolvable:$true] %s19
      %22 = dma.hbm_to_vmem [thread:$0]  %s1, 64, %s20, [#allocation4]
    $region9: #{tpu_custom_call.1} parent=1 // pred_fallthru
      _
    // Predicated region
    $region10: #{tpu_custom_call.1} parent=1 // pred_check
      _
    $region11: #{tpu_custom_call.1} parent=1 // pred_check_branch
      %24 = sbr.rel (0) target = $region13
    $region12: #{tpu_custom_call.1} parent=1 // pred_region
      _
    $region13: #{tpu_custom_call.1} parent=1 // pred_fallthru
      _
    // Predicated region
    $region14: #{tpu_custom_call.1} parent=1 // pred_check
      _
    $region15: #{tpu_custom_call.1} parent=1 // pred_check_branch
      %26 = sbr.rel (0) target = $region17
    $region16: #{tpu_custom_call.1} parent=1 // pred_region
      %27 = dma.done [#allocation4], 64
    $region17: #{tpu_custom_call.1} parent=1 // pred_fallthru
      _
    %v28 = vld [vmem:[#allocation3] sm:$0xf]
    %v29 = vld [vmem:[%s2] sm:$0x3]
    %v31 = vlaneseq
    %v32 = vshrl.u32 %v31, 7
    %v33 = vsub.s32 0, %v32
    %v34 = vrot.slane %v29, %v33
    %v35 = vlaneseq
    %v36 = vshrl.u32 %v35, 7
    %v37 = vsub.s32 1, %v36
    %v38 = vrot.slane %v29, %v37
    %v39 = vcombine.low %v34, %v38
    %v41 = vunpack.c.l.s4 1983009808
    %v42 = vunpack.c.0.s8 %v41
    %v43 = vlaneseq
    %v44 = vshrl.u32 %v43, 7
    %v45 = vsub.s32 %v42, %v44
    %v46 = vrot.slane %v39, %v45
    %v48 = vadd.f32 %v28, %v46
    %49 = vst [vmem:[#allocation6] sm:$0xf] %v48
    // Predicated region
    $region18: #{tpu_custom_call.1} parent=1 // pred_check
      _
    $region19: #{tpu_custom_call.1} parent=1 // pred_check_branch
      %51 = sbr.rel (0) target = $region21
    $region20: #{tpu_custom_call.1} parent=1 // pred_region
      %s53 = ssub.s32 64, 64
      %54 = vsyncadd [#allocation5], %s53
      %s56 = sshll.u32 [#allocation6], 4
      %s57 = int_to_ptr.vmem [resolvable:$true] %s56
      %59 = dma.vmem_to_hbm [thread:$0]  %s57, 64, %s3, [#allocation5]
    $region21: #{tpu_custom_call.1} parent=1 // pred_fallthru
      _
    // Predicated region
    $region22: #{tpu_custom_call.1} parent=1 // pred_check
      _
    $region23: #{tpu_custom_call.1} parent=1 // pred_check_branch
      %61 = sbr.rel (0) target = $region25
    $region24: #{tpu_custom_call.1} parent=1 // pred_region
      %62 = dma.done [#allocation5], 64
    $region25: #{tpu_custom_call.1} parent=1 // pred_fallthru
      _
    %63 = vsyncpa [#allocation4], 1
    %64 = vsyncpa [#allocation5], 1

</llo_original>
